<compile_context>
chip_gen: v6e
topology: v6e:2x2x1
jax: 0.10.0
libtpu: 0.0.40
codegen_flags: <defaults>
</compile_context>

<pallas_src>
import jax
import jax.numpy as jnp
import numpy as np
from jax.experimental import pallas as pl
from jax.experimental.pallas import tpu as pltpu

FEAT = 512
LEAKY_SLOPE = 0.01      # PyTorch nn.LeakyReLU default
BN_EPS = 1e-5           # PyTorch nn.BatchNorm1d default
LANE = 128

# (name, width, activation) in the exact order of the PyTorch forward() return tuple.
HEADS = (
    ("head",        5, "softmax"),
    ("body",        3, "softmax"),
    ("body_type",   1, "sigmoid"),
    ("leg",         3, "softmax"),
    ("foot",        3, "softmax"),
    ("gender",      1, "sigmoid"),
    ("bags",        3, "softmax"),
    ("body_colour", 9, "softmax"),
    ("leg_colour",  9, "softmax"),
    ("foot_colour", 9, "softmax"),
)
_TOTAL = sum(w for _, w, _ in HEADS)                    # 46
HEAD_PAD = ((_TOTAL + LANE - 1) // LANE) * LANE         # 128 -> lane-dense output

# Static (start, width, kind) lane segments of the concatenated head output.
_SEGMENTS = []
_off = 0
for _name, _w, _kind in HEADS:
    _SEGMENTS.append((_off, _w, _kind))
    _off += _w
_SEGMENTS = tuple(_SEGMENTS)


def _osnet_head_kernel(x_ref, w1_ref, b1_ref, wh_ref, bh_ref, o_ref):
    # Bottleneck Linear (BN already folded into w1/b1) -> LeakyReLU.  Dropout = identity (eval).
    x = x_ref[...]                                                       # (tm, 512) f32
    h = jnp.dot(x, w1_ref[...], preferred_element_type=jnp.float32)      # MXU, f32 accumulate
    h = h + b1_ref[...]
    h = jnp.where(h > 0, h, LEAKY_SLOPE * h)                             # LeakyReLU(0.01)

    # All 10 attribute heads as one lane-padded matmul -> (tm, 128) logits.
    logits = jnp.dot(h, wh_ref[...], preferred_element_type=jnp.float32) + bh_ref[...]

    # Per-head softmax / sigmoid using static lane-segment masks.  Everything stays
    # in vregs; the single (tm, 128) store is lane-dense (no masked partial stores).
    lane = jax.lax.broadcasted_iota(jnp.int32, logits.shape, dimension=1)
    out = jnp.zeros_like(logits)
    for start, width, kind in _SEGMENTS:                 # static, unrolled at trace time
        mask = (lane >= start) & (lane < start + width)
        if kind == "softmax":
            seg = jnp.where(mask, logits, -jnp.inf)
            m = jnp.max(seg, axis=-1, keepdims=True)
            e = jnp.exp(seg - m)                         # exactly 0 outside the segment
            d = jnp.sum(e, axis=-1, keepdims=True)
            out = out + e / d
        else:  # sigmoid (the width-1 heads)
            out = out + jnp.where(mask, jax.nn.sigmoid(logits), 0.0)
    o_ref[...] = out


def _round_up(n, m):
    return ((n + m - 1) // m) * m


def myosnet_head_forward(features, params):
    """Fused MyOsNet head.  features: (B, 512) backbone output (eval-mode semantics).

    Returns the 10-tuple (head, body, body_type, leg, foot, gender, bags,
    body_colour, leg_colour, foot_colour), matching the PyTorch forward()."""
    features = jnp.asarray(features, jnp.float32)
    B = features.shape[0]

    # ---- fold BatchNorm1d (eval / running stats) into the bottleneck Linear, in f32 ----
    w1 = jnp.asarray(params["linear_w"], jnp.float32)          # torch layout (out, in)
    b1 = jnp.asarray(params["linear_b"], jnp.float32)
    gamma = jnp.asarray(params["bn_gamma"], jnp.float32)
    beta = jnp.asarray(params["bn_beta"], jnp.float32)
    mean = jnp.asarray(params["bn_mean"], jnp.float32)
    var = jnp.asarray(params["bn_var"], jnp.float32)
    scale = gamma * jax.lax.rsqrt(var + BN_EPS)
    w1_f = w1.T * scale[None, :]                               # pre-transposed (in, out)
    b1_f = ((b1 - mean) * scale + beta).reshape(1, FEAT)

    # ---- concatenate the 10 head Linears into one lane-padded (512, 128) weight ----
    wh = jnp.concatenate(
        [jnp.asarray(params[f"{n}_w"], jnp.float32).T for n, _, _ in HEADS], axis=1)
    bh = jnp.concatenate(
        [jnp.asarray(params[f"{n}_b"], jnp.float32) for n, _, _ in HEADS], axis=0)
    wh = jnp.pad(wh, ((0, 0), (0, HEAD_PAD - _TOTAL)))
    bh = jnp.pad(bh, (0, HEAD_PAD - _TOTAL)).reshape(1, HEAD_PAD)

    # ---- batch padding / tiling ----
    if B <= 256:
        pb = _round_up(max(B, 8), 8)     # small batch: one un-gridded tile (no per-step overhead)
        tm = pb
    else:
        pb = _round_up(B, 256)           # tm=256 fills the 2x256 MXU on v6e/v7x
        tm = 256
    x = jnp.pad(features, ((0, pb - B), (0, 0)))

    out = pl.pallas_call(
        _osnet_head_kernel,
        out_shape=jax.ShapeDtypeStruct((pb, HEAD_PAD), jnp.float32),
        grid_spec=pltpu.PrefetchScalarGridSpec(
            num_scalar_prefetch=0,
            grid=(pb // tm,),
            in_specs=[
                pl.BlockSpec((tm, FEAT), lambda i: (i, 0)),         # feature tile
                pl.BlockSpec((FEAT, FEAT), lambda i: (0, 0)),       # folded bottleneck weight
                pl.BlockSpec((1, FEAT), lambda i: (0, 0)),          # folded bottleneck bias
                pl.BlockSpec((FEAT, HEAD_PAD), lambda i: (0, 0)),   # concatenated head weight
                pl.BlockSpec((1, HEAD_PAD), lambda i: (0, 0)),      # concatenated head bias
            ],
            out_specs=pl.BlockSpec((tm, HEAD_PAD), lambda i: (i, 0)),
        ),
        compiler_params=pltpu.CompilerParams(
            dimension_semantics=("parallel",),   # v7x: both TensorCores split the batch tiles
        ),
    )(x, w1_f, b1_f, wh, bh)

    # ---- slice the 10 heads back out of the lane-dense block ----
    return tuple(out[:B, s:s + w] for s, w, _ in _SEGMENTS)


def _ref_forward(features, params):
    """Pure-JAX reference (unfused, unfolded) for correctness checking."""
    x = jnp.asarray(features, jnp.float32)
    h = x @ jnp.asarray(params["linear_w"], jnp.float32).T + jnp.asarray(params["linear_b"], jnp.float32)
    h = (h - params["bn_mean"]) * jax.lax.rsqrt(params["bn_var"] + BN_EPS) * params["bn_gamma"] + params["bn_beta"]
    h = jnp.where(h > 0, h, LEAKY_SLOPE * h)          # LeakyReLU; Dropout identity in eval
    outs = []
    for name, _, kind in HEADS:
        z = h @ jnp.asarray(params[f"{name}_w"], jnp.float32).T + jnp.asarray(params[f"{name}_b"], jnp.float32)
        outs.append(jax.nn.softmax(z, axis=1) if kind == "softmax" else jax.nn.sigmoid(z))
    return tuple(outs)


if __name__ == "__main__":
    key = jax.random.PRNGKey(0)
    keys = iter(jax.random.split(key, 64))
    B = 2

    # Deterministic stand-in for the backbone output (backbone itself not reproduced).
    features = jax.random.normal(next(keys), (B, FEAT), jnp.float32)

    params = {
        "linear_w": 0.05 * jax.random.normal(next(keys), (FEAT, FEAT), jnp.float32),
        "linear_b": 0.05 * jax.random.normal(next(keys), (FEAT,), jnp.float32),
        "bn_gamma": 1.0 + 0.1 * jax.random.normal(next(keys), (FEAT,), jnp.float32),
        "bn_beta": 0.1 * jax.random.normal(next(keys), (FEAT,), jnp.float32),
        "bn_mean": 0.1 * jax.random.normal(next(keys), (FEAT,), jnp.float32),
        "bn_var": jax.nn.softplus(jax.random.normal(next(keys), (FEAT,), jnp.float32)) + 0.5,
    }
    for name, width, _ in HEADS:
        params[f"{name}_w"] = 0.05 * jax.random.normal(next(keys), (width, FEAT), jnp.float32)
        params[f"{name}_b"] = 0.05 * jax.random.normal(next(keys), (width,), jnp.float32)

    fwd = jax.jit(myosnet_head_forward)
    outs = jax.block_until_ready(fwd(features, params))

    refs = _ref_forward(features, params)
    for (name, _, _), o, r in zip(HEADS, outs, refs):
        np.testing.assert_allclose(np.asarray(o), np.asarray(r), rtol=1e-4, atol=1e-5,
                                    err_msg=f"mismatch on head '{name}'")

    print("KERNEL_OK")
</pallas_src>

<mosaic_0001>
module attributes {stable_mosaic.version = 11 : i64} {
  func.func @_osnet_head_kernel(%arg0: i32, %arg1: memref<8x512xf32, #tpu.memory_space<vmem>>, %arg2: memref<512x512xf32, #tpu.memory_space<vmem>>, %arg3: memref<1x512xf32, #tpu.memory_space<vmem>>, %arg4: memref<512x128xf32, #tpu.memory_space<vmem>>, %arg5: memref<1x128xf32, #tpu.memory_space<vmem>>, %arg6: memref<8x128xf32, #tpu.memory_space<vmem>>) attributes {dimension_semantics = [#tpu.dimension_semantics<parallel>], iteration_bounds = array<i64: 1>, scalar_prefetch = 0 : i64, scratch_operands = 0 : i64, tpu.core_type = #tpu.core_type<tc>, window_params = [{transform_indices = @transform_0, window_bounds = array<i64: 8, 512>}, {pipeline_mode = #tpu.pipeline_mode<synchronous>, transform_indices = @transform_1, window_bounds = array<i64: 512, 512>}, {pipeline_mode = #tpu.pipeline_mode<synchronous>, transform_indices = @transform_2, window_bounds = array<i64: 1, 512>}, {pipeline_mode = #tpu.pipeline_mode<synchronous>, transform_indices = @transform_3, window_bounds = array<i64: 512, 128>}, {pipeline_mode = #tpu.pipeline_mode<synchronous>, transform_indices = @transform_4, window_bounds = array<i64: 1, 128>}, {transform_indices = @transform_5, window_bounds = array<i64: 8, 128>}]} {
    %c0 = arith.constant 0 : index
    %c0_0 = arith.constant 0 : index
    %0 = vector.load %arg1[%c0, %c0_0] : memref<8x512xf32, #tpu.memory_space<vmem>>, vector<8x512xf32>
    %c0_1 = arith.constant 0 : index
    %c0_2 = arith.constant 0 : index
    %1 = vector.load %arg2[%c0_1, %c0_2] : memref<512x512xf32, #tpu.memory_space<vmem>>, vector<512x512xf32>
    %cst = arith.constant dense<0.000000e+00> : vector<8x512xf32>
    %2 = tpu.matmul %0, %1, %cst {dimension_numbers = #tpu.dot_dimension_numbers<[1], [0], [0], [1], [0, 0, 1, 1], [], []>} : vector<8x512xf32>, vector<512x512xf32>, vector<8x512xf32> -> vector<8x512xf32>
    %c0_3 = arith.constant 0 : index
    %c0_4 = arith.constant 0 : index
    %3 = vector.load %arg3[%c0_3, %c0_4] : memref<1x512xf32, #tpu.memory_space<vmem>>, vector<1x512xf32>
    %4 = vector.broadcast %3 : vector<1x512xf32> to vector<8x512xf32>
    %5 = arith.addf %2, %4 : vector<8x512xf32>
    %cst_5 = arith.constant 0.000000e+00 : f32
    %6 = vector.broadcast %cst_5 : f32 to vector<8x512xf32>
    %7 = arith.cmpf ogt, %5, %6 : vector<8x512xf32>
    %cst_6 = arith.constant 0.00999999977 : f32
    %8 = vector.broadcast %cst_6 : f32 to vector<8x512xf32>
    %9 = arith.mulf %8, %5 : vector<8x512xf32>
    %10 = arith.select %7, %5, %9 : vector<8x512xi1>, vector<8x512xf32>
    %c0_7 = arith.constant 0 : index
    %c0_8 = arith.constant 0 : index
    %11 = vector.load %arg4[%c0_7, %c0_8] : memref<512x128xf32, #tpu.memory_space<vmem>>, vector<512x128xf32>
    %cst_9 = arith.constant dense<0.000000e+00> : vector<8x128xf32>
    %12 = tpu.matmul %10, %11, %cst_9 {dimension_numbers = #tpu.dot_dimension_numbers<[1], [0], [0], [1], [0, 0, 1, 1], [], []>} : vector<8x512xf32>, vector<512x128xf32>, vector<8x128xf32> -> vector<8x128xf32>
    %c0_10 = arith.constant 0 : index
    %c0_11 = arith.constant 0 : index
    %13 = vector.load %arg5[%c0_10, %c0_11] : memref<1x128xf32, #tpu.memory_space<vmem>>, vector<1x128xf32>
    %14 = vector.broadcast %13 : vector<1x128xf32> to vector<8x128xf32>
    %15 = arith.addf %12, %14 : vector<8x128xf32>
    %16 = tpu.iota {dimensions = array<i32: 1>} : vector<8x128xi32>
    %cst_12 = arith.constant 0.000000e+00 : f32
    %17 = vector.broadcast %cst_12 : f32 to vector<8x128xf32>
    %c0_i32 = arith.constant 0 : i32
    %18 = vector.broadcast %c0_i32 : i32 to vector<8x128xi32>
    %19 = arith.cmpi sge, %16, %18 : vector<8x128xi32>
    %c5_i32 = arith.constant 5 : i32
    %20 = vector.broadcast %c5_i32 : i32 to vector<8x128xi32>
    %21 = arith.cmpi slt, %16, %20 : vector<8x128xi32>
    %22 = arith.andi %19, %21 : vector<8x128xi1>
    %cst_13 = arith.constant 0xFF800000 : f32
    %23 = vector.broadcast %cst_13 : f32 to vector<8x128xf32>
    %24 = arith.select %22, %15, %23 : vector<8x128xi1>, vector<8x128xf32>
    %cst_14 = arith.constant dense<0xFF800000> : vector<8xf32>
    %25 = vector.multi_reduction <maximumf>, %24, %cst_14 [1] : vector<8x128xf32> to vector<8xf32>
    %26 = vector.shape_cast %25 : vector<8xf32> to vector<8x1xf32>
    %27 = vector.broadcast %26 : vector<8x1xf32> to vector<8x128xf32>
    %28 = arith.subf %24, %27 : vector<8x128xf32>
    %29 = math.exp %28 : vector<8x128xf32>
    %cst_15 = arith.constant dense<0.000000e+00> : vector<8xf32>
    %30 = vector.multi_reduction <add>, %29, %cst_15 [1] : vector<8x128xf32> to vector<8xf32>
    %31 = vector.shape_cast %30 : vector<8xf32> to vector<8x1xf32>
    %32 = vector.broadcast %31 : vector<8x1xf32> to vector<8x128xf32>
    %33 = arith.divf %29, %32 : vector<8x128xf32>
    %34 = arith.addf %17, %33 : vector<8x128xf32>
    %c5_i32_16 = arith.constant 5 : i32
    %35 = vector.broadcast %c5_i32_16 : i32 to vector<8x128xi32>
    %36 = arith.cmpi sge, %16, %35 : vector<8x128xi32>
    %c8_i32 = arith.constant 8 : i32
    %37 = vector.broadcast %c8_i32 : i32 to vector<8x128xi32>
    %38 = arith.cmpi slt, %16, %37 : vector<8x128xi32>
    %39 = arith.andi %36, %38 : vector<8x128xi1>
    %cst_17 = arith.constant 0xFF800000 : f32
    %40 = vector.broadcast %cst_17 : f32 to vector<8x128xf32>
    %41 = arith.select %39, %15, %40 : vector<8x128xi1>, vector<8x128xf32>
    %cst_18 = arith.constant dense<0xFF800000> : vector<8xf32>
    %42 = vector.multi_reduction <maximumf>, %41, %cst_18 [1] : vector<8x128xf32> to vector<8xf32>
    %43 = vector.shape_cast %42 : vector<8xf32> to vector<8x1xf32>
    %44 = vector.broadcast %43 : vector<8x1xf32> to vector<8x128xf32>
    %45 = arith.subf %41, %44 : vector<8x128xf32>
    %46 = math.exp %45 : vector<8x128xf32>
    %cst_19 = arith.constant dense<0.000000e+00> : vector<8xf32>
    %47 = vector.multi_reduction <add>, %46, %cst_19 [1] : vector<8x128xf32> to vector<8xf32>
    %48 = vector.shape_cast %47 : vector<8xf32> to vector<8x1xf32>
    %49 = vector.broadcast %48 : vector<8x1xf32> to vector<8x128xf32>
    %50 = arith.divf %46, %49 : vector<8x128xf32>
    %51 = arith.addf %34, %50 : vector<8x128xf32>
    %c8_i32_20 = arith.constant 8 : i32
    %52 = vector.broadcast %c8_i32_20 : i32 to vector<8x128xi32>
    %53 = arith.cmpi sge, %16, %52 : vector<8x128xi32>
    %c9_i32 = arith.constant 9 : i32
    %54 = vector.broadcast %c9_i32 : i32 to vector<8x128xi32>
    %55 = arith.cmpi slt, %16, %54 : vector<8x128xi32>
    %56 = arith.andi %53, %55 : vector<8x128xi1>
    %57 = arith.negf %15 : vector<8x128xf32>
    %58 = math.exp %57 : vector<8x128xf32>
    %cst_21 = arith.constant 1.000000e+00 : f32
    %59 = vector.broadcast %cst_21 : f32 to vector<8x128xf32>
    %60 = arith.addf %59, %58 : vector<8x128xf32>
    %61 = arith.divf %59, %60 : vector<8x128xf32>
    %cst_22 = arith.constant 0.000000e+00 : f32
    %62 = vector.broadcast %cst_22 : f32 to vector<8x128xf32>
    %63 = arith.select %56, %61, %62 : vector<8x128xi1>, vector<8x128xf32>
    %64 = arith.addf %51, %63 : vector<8x128xf32>
    %c9_i32_23 = arith.constant 9 : i32
    %65 = vector.broadcast %c9_i32_23 : i32 to vector<8x128xi32>
    %66 = arith.cmpi sge, %16, %65 : vector<8x128xi32>
    %c12_i32 = arith.constant 12 : i32
    %67 = vector.broadcast %c12_i32 : i32 to vector<8x128xi32>
    %68 = arith.cmpi slt, %16, %67 : vector<8x128xi32>
    %69 = arith.andi %66, %68 : vector<8x128xi1>
    %cst_24 = arith.constant 0xFF800000 : f32
    %70 = vector.broadcast %cst_24 : f32 to vector<8x128xf32>
    %71 = arith.select %69, %15, %70 : vector<8x128xi1>, vector<8x128xf32>
    %cst_25 = arith.constant dense<0xFF800000> : vector<8xf32>
    %72 = vector.multi_reduction <maximumf>, %71, %cst_25 [1] : vector<8x128xf32> to vector<8xf32>
    %73 = vector.shape_cast %72 : vector<8xf32> to vector<8x1xf32>
    %74 = vector.broadcast %73 : vector<8x1xf32> to vector<8x128xf32>
    %75 = arith.subf %71, %74 : vector<8x128xf32>
    %76 = math.exp %75 : vector<8x128xf32>
    %cst_26 = arith.constant dense<0.000000e+00> : vector<8xf32>
    %77 = vector.multi_reduction <add>, %76, %cst_26 [1] : vector<8x128xf32> to vector<8xf32>
    %78 = vector.shape_cast %77 : vector<8xf32> to vector<8x1xf32>
    %79 = vector.broadcast %78 : vector<8x1xf32> to vector<8x128xf32>
    %80 = arith.divf %76, %79 : vector<8x128xf32>
    %81 = arith.addf %64, %80 : vector<8x128xf32>
    %c12_i32_27 = arith.constant 12 : i32
    %82 = vector.broadcast %c12_i32_27 : i32 to vector<8x128xi32>
    %83 = arith.cmpi sge, %16, %82 : vector<8x128xi32>
    %c15_i32 = arith.constant 15 : i32
    %84 = vector.broadcast %c15_i32 : i32 to vector<8x128xi32>
    %85 = arith.cmpi slt, %16, %84 : vector<8x128xi32>
    %86 = arith.andi %83, %85 : vector<8x128xi1>
    %cst_28 = arith.constant 0xFF800000 : f32
    %87 = vector.broadcast %cst_28 : f32 to vector<8x128xf32>
    %88 = arith.select %86, %15, %87 : vector<8x128xi1>, vector<8x128xf32>
    %cst_29 = arith.constant dense<0xFF800000> : vector<8xf32>
    %89 = vector.multi_reduction <maximumf>, %88, %cst_29 [1] : vector<8x128xf32> to vector<8xf32>
    %90 = vector.shape_cast %89 : vector<8xf32> to vector<8x1xf32>
    %91 = vector.broadcast %90 : vector<8x1xf32> to vector<8x128xf32>
    %92 = arith.subf %88, %91 : vector<8x128xf32>
    %93 = math.exp %92 : vector<8x128xf32>
    %cst_30 = arith.constant dense<0.000000e+00> : vector<8xf32>
    %94 = vector.multi_reduction <add>, %93, %cst_30 [1] : vector<8x128xf32> to vector<8xf32>
    %95 = vector.shape_cast %94 : vector<8xf32> to vector<8x1xf32>
    %96 = vector.broadcast %95 : vector<8x1xf32> to vector<8x128xf32>
    %97 = arith.divf %93, %96 : vector<8x128xf32>
    %98 = arith.addf %81, %97 : vector<8x128xf32>
    %c15_i32_31 = arith.constant 15 : i32
    %99 = vector.broadcast %c15_i32_31 : i32 to vector<8x128xi32>
    %100 = arith.cmpi sge, %16, %99 : vector<8x128xi32>
    %c16_i32 = arith.constant 16 : i32
    %101 = vector.broadcast %c16_i32 : i32 to vector<8x128xi32>
    %102 = arith.cmpi slt, %16, %101 : vector<8x128xi32>
    %103 = arith.andi %100, %102 : vector<8x128xi1>
    %104 = arith.negf %15 : vector<8x128xf32>
    %105 = math.exp %104 : vector<8x128xf32>
    %cst_32 = arith.constant 1.000000e+00 : f32
    %106 = vector.broadcast %cst_32 : f32 to vector<8x128xf32>
    %107 = arith.addf %106, %105 : vector<8x128xf32>
    %108 = arith.divf %106, %107 : vector<8x128xf32>
    %cst_33 = arith.constant 0.000000e+00 : f32
    %109 = vector.broadcast %cst_33 : f32 to vector<8x128xf32>
    %110 = arith.select %103, %108, %109 : vector<8x128xi1>, vector<8x128xf32>
    %111 = arith.addf %98, %110 : vector<8x128xf32>
    %c16_i32_34 = arith.constant 16 : i32
    %112 = vector.broadcast %c16_i32_34 : i32 to vector<8x128xi32>
    %113 = arith.cmpi sge, %16, %112 : vector<8x128xi32>
    %c19_i32 = arith.constant 19 : i32
    %114 = vector.broadcast %c19_i32 : i32 to vector<8x128xi32>
    %115 = arith.cmpi slt, %16, %114 : vector<8x128xi32>
    %116 = arith.andi %113, %115 : vector<8x128xi1>
    %cst_35 = arith.constant 0xFF800000 : f32
    %117 = vector.broadcast %cst_35 : f32 to vector<8x128xf32>
    %118 = arith.select %116, %15, %117 : vector<8x128xi1>, vector<8x128xf32>
    %cst_36 = arith.constant dense<0xFF800000> : vector<8xf32>
    %119 = vector.multi_reduction <maximumf>, %118, %cst_36 [1] : vector<8x128xf32> to vector<8xf32>
    %120 = vector.shape_cast %119 : vector<8xf32> to vector<8x1xf32>
    %121 = vector.broadcast %120 : vector<8x1xf32> to vector<8x128xf32>
    %122 = arith.subf %118, %121 : vector<8x128xf32>
    %123 = math.exp %122 : vector<8x128xf32>
    %cst_37 = arith.constant dense<0.000000e+00> : vector<8xf32>
    %124 = vector.multi_reduction <add>, %123, %cst_37 [1] : vector<8x128xf32> to vector<8xf32>
    %125 = vector.shape_cast %124 : vector<8xf32> to vector<8x1xf32>
    %126 = vector.broadcast %125 : vector<8x1xf32> to vector<8x128xf32>
    %127 = arith.divf %123, %126 : vector<8x128xf32>
    %128 = arith.addf %111, %127 : vector<8x128xf32>
    %c19_i32_38 = arith.constant 19 : i32
    %129 = vector.broadcast %c19_i32_38 : i32 to vector<8x128xi32>
    %130 = arith.cmpi sge, %16, %129 : vector<8x128xi32>
    %c28_i32 = arith.constant 28 : i32
    %131 = vector.broadcast %c28_i32 : i32 to vector<8x128xi32>
    %132 = arith.cmpi slt, %16, %131 : vector<8x128xi32>
    %133 = arith.andi %130, %132 : vector<8x128xi1>
    %cst_39 = arith.constant 0xFF800000 : f32
    %134 = vector.broadcast %cst_39 : f32 to vector<8x128xf32>
    %135 = arith.select %133, %15, %134 : vector<8x128xi1>, vector<8x128xf32>
    %cst_40 = arith.constant dense<0xFF800000> : vector<8xf32>
    %136 = vector.multi_reduction <maximumf>, %135, %cst_40 [1] : vector<8x128xf32> to vector<8xf32>
    %137 = vector.shape_cast %136 : vector<8xf32> to vector<8x1xf32>
    %138 = vector.broadcast %137 : vector<8x1xf32> to vector<8x128xf32>
    %139 = arith.subf %135, %138 : vector<8x128xf32>
    %140 = math.exp %139 : vector<8x128xf32>
    %cst_41 = arith.constant dense<0.000000e+00> : vector<8xf32>
    %141 = vector.multi_reduction <add>, %140, %cst_41 [1] : vector<8x128xf32> to vector<8xf32>
    %142 = vector.shape_cast %141 : vector<8xf32> to vector<8x1xf32>
    %143 = vector.broadcast %142 : vector<8x1xf32> to vector<8x128xf32>
    %144 = arith.divf %140, %143 : vector<8x128xf32>
    %145 = arith.addf %128, %144 : vector<8x128xf32>
    %c28_i32_42 = arith.constant 28 : i32
    %146 = vector.broadcast %c28_i32_42 : i32 to vector<8x128xi32>
    %147 = arith.cmpi sge, %16, %146 : vector<8x128xi32>
    %c37_i32 = arith.constant 37 : i32
    %148 = vector.broadcast %c37_i32 : i32 to vector<8x128xi32>
    %149 = arith.cmpi slt, %16, %148 : vector<8x128xi32>
    %150 = arith.andi %147, %149 : vector<8x128xi1>
    %cst_43 = arith.constant 0xFF800000 : f32
    %151 = vector.broadcast %cst_43 : f32 to vector<8x128xf32>
    %152 = arith.select %150, %15, %151 : vector<8x128xi1>, vector<8x128xf32>
    %cst_44 = arith.constant dense<0xFF800000> : vector<8xf32>
    %153 = vector.multi_reduction <maximumf>, %152, %cst_44 [1] : vector<8x128xf32> to vector<8xf32>
    %154 = vector.shape_cast %153 : vector<8xf32> to vector<8x1xf32>
    %155 = vector.broadcast %154 : vector<8x1xf32> to vector<8x128xf32>
    %156 = arith.subf %152, %155 : vector<8x128xf32>
    %157 = math.exp %156 : vector<8x128xf32>
    %cst_45 = arith.constant dense<0.000000e+00> : vector<8xf32>
    %158 = vector.multi_reduction <add>, %157, %cst_45 [1] : vector<8x128xf32> to vector<8xf32>
    %159 = vector.shape_cast %158 : vector<8xf32> to vector<8x1xf32>
    %160 = vector.broadcast %159 : vector<8x1xf32> to vector<8x128xf32>
    %161 = arith.divf %157, %160 : vector<8x128xf32>
    %162 = arith.addf %145, %161 : vector<8x128xf32>
    %c37_i32_46 = arith.constant 37 : i32
    %163 = vector.broadcast %c37_i32_46 : i32 to vector<8x128xi32>
    %164 = arith.cmpi sge, %16, %163 : vector<8x128xi32>
    %c46_i32 = arith.constant 46 : i32
    %165 = vector.broadcast %c46_i32 : i32 to vector<8x128xi32>
    %166 = arith.cmpi slt, %16, %165 : vector<8x128xi32>
    %167 = arith.andi %164, %166 : vector<8x128xi1>
    %cst_47 = arith.constant 0xFF800000 : f32
    %168 = vector.broadcast %cst_47 : f32 to vector<8x128xf32>
    %169 = arith.select %167, %15, %168 : vector<8x128xi1>, vector<8x128xf32>
    %cst_48 = arith.constant dense<0xFF800000> : vector<8xf32>
    %170 = vector.multi_reduction <maximumf>, %169, %cst_48 [1] : vector<8x128xf32> to vector<8xf32>
    %171 = vector.shape_cast %170 : vector<8xf32> to vector<8x1xf32>
    %172 = vector.broadcast %171 : vector<8x1xf32> to vector<8x128xf32>
    %173 = arith.subf %169, %172 : vector<8x128xf32>
    %174 = math.exp %173 : vector<8x128xf32>
    %cst_49 = arith.constant dense<0.000000e+00> : vector<8xf32>
    %175 = vector.multi_reduction <add>, %174, %cst_49 [1] : vector<8x128xf32> to vector<8xf32>
    %176 = vector.shape_cast %175 : vector<8xf32> to vector<8x1xf32>
    %177 = vector.broadcast %176 : vector<8x1xf32> to vector<8x128xf32>
    %178 = arith.divf %174, %177 : vector<8x128xf32>
    %179 = arith.addf %162, %178 : vector<8x128xf32>
    %c0_50 = arith.constant 0 : index
    %c0_51 = arith.constant 0 : index
    %180 = vector.load %arg6[%c0_50, %c0_51] : memref<8x128xf32, #tpu.memory_space<vmem>>, vector<8x128xf32>
    tpu.vector_store %arg6[%c0_50, %c0_51], %179 {strides = array<i32>} : memref<8x128xf32, #tpu.memory_space<vmem>>, vector<8x128xf32>,
    return
  }
  func.func @transform_0(%arg0: i32) -> (i32, i32) {
    %c0_i32 = arith.constant 0 : i32
    %c0_i32_0 = arith.constant 0 : i32
    return %arg0, %c0_i32 : i32, i32
  }
  func.func @transform_1(%arg0: i32) -> (i32, i32) {
    %c0_i32 = arith.constant 0 : i32
    %c0_i32_0 = arith.constant 0 : i32
    %c0_i32_1 = arith.constant 0 : i32
    return %c0_i32, %c0_i32_0 : i32, i32
  }
  func.func @transform_2(%arg0: i32) -> (i32, i32) {
    %c0_i32 = arith.constant 0 : i32
    %c0_i32_0 = arith.constant 0 : i32
    %c0_i32_1 = arith.constant 0 : i32
    return %c0_i32, %c0_i32_0 : i32, i32
  }
  func.func @transform_3(%arg0: i32) -> (i32, i32) {
    %c0_i32 = arith.constant 0 : i32
    %c0_i32_0 = arith.constant 0 : i32
    %c0_i32_1 = arith.constant 0 : i32
    return %c0_i32, %c0_i32_0 : i32, i32
  }
  func.func @transform_4(%arg0: i32) -> (i32, i32) {
    %c0_i32 = arith.constant 0 : i32
    %c0_i32_0 = arith.constant 0 : i32
    %c0_i32_1 = arith.constant 0 : i32
    return %c0_i32, %c0_i32_0 : i32, i32
  }
  func.func @transform_5(%arg0: i32) -> (i32, i32) {
    %c0_i32 = arith.constant 0 : i32
    %c0_i32_0 = arith.constant 0 : i32
    return %arg0, %c0_i32 : i32, i32
  }
}

</mosaic_0001>

<llo_original>
// kernel: myosnet_head_forward.1
$region0: #{myosnet_head_forward.1}
  #allocation0 [shape = 'u32[]', space=smem, size = 0x4, offset = 0x4, fixed_abs, tag = 'smem constant byte address 0x4 - core index']
  #allocation1 [shape = 'u32[144,128]{1,0:T(1,128)}', space=vmem, size = 0x12000, scoped, tag = 'internal scratch']
  %s0 = inlined_call_operand.vmem [shape: f32[8,512], index: 0, kind: input, shape index: {}]
  %s1 = inlined_call_operand.vmem [shape: f32[512,512], index: 1, kind: input, shape index: {}]
  %s2 = inlined_call_operand.vmem [shape: f32[1,512], index: 2, kind: input, shape index: {}]
  %s3 = inlined_call_operand.vmem [shape: f32[512,128], index: 3, kind: input, shape index: {}]
  %s4 = inlined_call_operand.vmem [shape: f32[1,128], index: 4, kind: input, shape index: {}]
  %s5 = inlined_call_operand.vmem [shape: f32[8,128], index: 5, kind: output, shape index: {}]
  %s6 = sld [smem:[#allocation0]]
  $region30: #{myosnet_head_forward.1} parent=0
    _
  %s8 = ssub.s32 1, %s6
  %s9 = scalar_select 0, %s8, %s6
  // Predicated region
  $region2: #{myosnet_head_forward.1} parent=0 // pred_check
    _
  $region3: #{myosnet_head_forward.1} parent=0 // pred_check_branch
    %11 = sbr.rel (0) target = $region5
  $region4: #{myosnet_head_forward.1} parent=0 // pred_region
    _
  $region5: #{myosnet_head_forward.1} parent=0 // pred_fallthru
    _
  // Predicated region
  $region6: #{myosnet_head_forward.1} parent=0 // pred_check
    _
  $region7: #{myosnet_head_forward.1} parent=0 // pred_check_branch
    %13 = sbr.rel (0) target = $region9
  $region8: #{myosnet_head_forward.1} parent=0 // pred_region
    _
  $region9: #{myosnet_head_forward.1} parent=0 // pred_fallthru
    _
  // Predicated region
  $region10: #{myosnet_head_forward.1} parent=0 // pred_check
    _
  $region11: #{myosnet_head_forward.1} parent=0 // pred_check_branch
    %15 = sbr.rel (0) target = $region13
  $region12: #{myosnet_head_forward.1} parent=0 // pred_region
    _
  $region13: #{myosnet_head_forward.1} parent=0 // pred_fallthru
    _
  // Predicated region
  $region14: #{myosnet_head_forward.1} parent=0 // pred_check
    _
  $region15: #{myosnet_head_forward.1} parent=0 // pred_check_branch
    %17 = sbr.rel (0) target = $region17
  $region16: #{myosnet_head_forward.1} parent=0 // pred_region
    _
  $region17: #{myosnet_head_forward.1} parent=0 // pred_fallthru
    _
  // Predicated region
  $region18: #{myosnet_head_forward.1} parent=0 // pred_check
    _
  $region19: #{myosnet_head_forward.1} parent=0 // pred_check_branch
    %19 = sbr.rel (0) target = $region21
  $region20: #{myosnet_head_forward.1} parent=0 // pred_region
    _
  $region21: #{myosnet_head_forward.1} parent=0 // pred_fallthru
    _
  %v20 = vld [vmem:[%s0] sm:$0xff]
  %v21 = vld [vmem:[%s0 + $0x8] sm:$0xff]
  %v22 = vld [vmem:[%s0 + $0x10] sm:$0xff]
  %v23 = vld [vmem:[%s0 + $0x18] sm:$0xff]
  %v24 = vld [vmem:[%s1] sm:$0xff]
  %v25 = vld [vmem:[%s1 + $0x8] sm:$0xff]
  %v26 = vld [vmem:[%s1 + $0x10] sm:$0xff]
  %v27 = vld [vmem:[%s1 + $0x18] sm:$0xff]
  %v28 = vld [vmem:[%s1 + $0x20] sm:$0xff]
  %v29 = vld [vmem:[%s1 + $0x28] sm:$0xff]
  %v30 = vld [vmem:[%s1 + $0x30] sm:$0xff]
  %v31 = vld [vmem:[%s1 + $0x38] sm:$0xff]
  %v32 = vld [vmem:[%s1 + $0x40] sm:$0xff]
  %v33 = vld [vmem:[%s1 + $0x48] sm:$0xff]
  %v34 = vld [vmem:[%s1 + $0x50] sm:$0xff]
  %v35 = vld [vmem:[%s1 + $0x58] sm:$0xff]
  %v36 = vld [vmem:[%s1 + $0x60] sm:$0xff]
  %v37 = vld [vmem:[%s1 + $0x68] sm:$0xff]
  %v38 = vld [vmem:[%s1 + $0x70] sm:$0xff]
  %v39 = vld [vmem:[%s1 + $0x78] sm:$0xff]
  %v40 = vld [vmem:[%s1 + $0x80] sm:$0xff]
  %v41 = vld [vmem:[%s1 + $0x88] sm:$0xff]
  %v42 = vld [vmem:[%s1 + $0x90] sm:$0xff]
  %v43 = vld [vmem:[%s1 + $0x98] sm:$0xff]
  %v44 = vld [vmem:[%s1 + $0xa0] sm:$0xff]
  %v45 = vld [vmem:[%s1 + $0xa8] sm:$0xff]
  %v46 = vld [vmem:[%s1 + $0xb0] sm:$0xff]
  %v47 = vld [vmem:[%s1 + $0xb8] sm:$0xff]
  %v48 = vld [vmem:[%s1 + $0xc0] sm:$0xff]
  %v49 = vld [vmem:[%s1 + $0xc8] sm:$0xff]
  %v50 = vld [vmem:[%s1 + $0xd0] sm:$0xff]
  %v51 = vld [vmem:[%s1 + $0xd8] sm:$0xff]
  %v52 = vld [vmem:[%s1 + $0xe0] sm:$0xff]
  %v53 = vld [vmem:[%s1 + $0xe8] sm:$0xff]
  %v54 = vld [vmem:[%s1 + $0xf0] sm:$0xff]
  %v55 = vld [vmem:[%s1 + $0xf8] sm:$0xff]
  %v56 = vld [vmem:[%s1 + $0x100] sm:$0xff]
  %v57 = vld [vmem:[%s1 + $0x108] sm:$0xff]
  %v58 = vld [vmem:[%s1 + $0x110] sm:$0xff]
  %v59 = vld [vmem:[%s1 + $0x118] sm:$0xff]
  %v60 = vld [vmem:[%s1 + $0x120] sm:$0xff]
  %v61 = vld [vmem:[%s1 + $0x128] sm:$0xff]
  %v62 = vld [vmem:[%s1 + $0x130] sm:$0xff]
  %v63 = vld [vmem:[%s1 + $0x138] sm:$0xff]
  %v64 = vld [vmem:[%s1 + $0x140] sm:$0xff]
  %v65 = vld [vmem:[%s1 + $0x148] sm:$0xff]
  %v66 = vld [vmem:[%s1 + $0x150] sm:$0xff]
  %v67 = vld [vmem:[%s1 + $0x158] sm:$0xff]
  %v68 = vld [vmem:[%s1 + $0x160] sm:$0xff]
  %v69 = vld [vmem:[%s1 + $0x168] sm:$0xff]
  %v70 = vld [vmem:[%s1 + $0x170] sm:$0xff]
  %v71 = vld [vmem:[%s1 + $0x178] sm:$0xff]
  %v72 = vld [vmem:[%s1 + $0x180] sm:$0xff]
  %v73 = vld [vmem:[%s1 + $0x188] sm:$0xff]
  %v74 = vld [vmem:[%s1 + $0x190] sm:$0xff]
  %v75 = vld [vmem:[%s1 + $0x198] sm:$0xff]
  %v76 = vld [vmem:[%s1 + $0x1a0] sm:$0xff]
  %v77 = vld [vmem:[%s1 + $0x1a8] sm:$0xff]
  %v78 = vld [vmem:[%s1 + $0x1b0] sm:$0xff]
  %v79 = vld [vmem:[%s1 + $0x1b8] sm:$0xff]
  %v80 = vld [vmem:[%s1 + $0x1c0] sm:$0xff]
  %v81 = vld [vmem:[%s1 + $0x1c8] sm:$0xff]
  %v82 = vld [vmem:[%s1 + $0x1d0] sm:$0xff]
  %v83 = vld [vmem:[%s1 + $0x1d8] sm:$0xff]
  %v84 = vld [vmem:[%s1 + $0x1e0] sm:$0xff]
  %v85 = vld [vmem:[%s1 + $0x1e8] sm:$0xff]
  %v86 = vld [vmem:[%s1 + $0x1f0] sm:$0xff]
  %v87 = vld [vmem:[%s1 + $0x1f8] sm:$0xff]
  %v88 = vld [vmem:[%s1 + $0x200] sm:$0xff]
  %v89 = vld [vmem:[%s1 + $0x208] sm:$0xff]
  %v90 = vld [vmem:[%s1 + $0x210] sm:$0xff]
  %v91 = vld [vmem:[%s1 + $0x218] sm:$0xff]
  %v92 = vld [vmem:[%s1 + $0x220] sm:$0xff]
  %v93 = vld [vmem:[%s1 + $0x228] sm:$0xff]
  %v94 = vld [vmem:[%s1 + $0x230] sm:$0xff]
  %v95 = vld [vmem:[%s1 + $0x238] sm:$0xff]
  %v96 = vld [vmem:[%s1 + $0x240] sm:$0xff]
  %v97 = vld [vmem:[%s1 + $0x248] sm:$0xff]
  %v98 = vld [vmem:[%s1 + $0x250] sm:$0xff]
  %v99 = vld [vmem:[%s1 + $0x258] sm:$0xff]
  %v100 = vld [vmem:[%s1 + $0x260] sm:$0xff]
  %v101 = vld [vmem:[%s1 + $0x268] sm:$0xff]
  %v102 = vld [vmem:[%s1 + $0x270] sm:$0xff]
  %v103 = vld [vmem:[%s1 + $0x278] sm:$0xff]
  %v104 = vld [vmem:[%s1 + $0x280] sm:$0xff]
  %v105 = vld [vmem:[%s1 + $0x288] sm:$0xff]
  %v106 = vld [vmem:[%s1 + $0x290] sm:$0xff]
  %v107 = vld [vmem:[%s1 + $0x298] sm:$0xff]
  %v108 = vld [vmem:[%s1 + $0x2a0] sm:$0xff]
  %v109 = vld [vmem:[%s1 + $0x2a8] sm:$0xff]
  %v110 = vld [vmem:[%s1 + $0x2b0] sm:$0xff]
  %v111 = vld [vmem:[%s1 + $0x2b8] sm:$0xff]
  %v112 = vld [vmem:[%s1 + $0x2c0] sm:$0xff]
  %v113 = vld [vmem:[%s1 + $0x2c8] sm:$0xff]
  %v114 = vld [vmem:[%s1 + $0x2d0] sm:$0xff]
  %v115 = vld [vmem:[%s1 + $0x2d8] sm:$0xff]
  %v116 = vld [vmem:[%s1 + $0x2e0] sm:$0xff]
  %v117 = vld [vmem:[%s1 + $0x2e8] sm:$0xff]
  %v118 = vld [vmem:[%s1 + $0x2f0] sm:$0xff]
  %v119 = vld [vmem:[%s1 + $0x2f8] sm:$0xff]
  %v120 = vld [vmem:[%s1 + $0x300] sm:$0xff]
  %v121 = vld [vmem:[%s1 + $0x308] sm:$0xff]
  %v122 = vld [vmem:[%s1 + $0x310] sm:$0xff]
  %v123 = vld [vmem:[%s1 + $0x318] sm:$0xff]
  %v124 = vld [vmem:[%s1 + $0x320] sm:$0xff]
  %v125 = vld [vmem:[%s1 + $0x328] sm:$0xff]
  %v126 = vld [vmem:[%s1 + $0x330] sm:$0xff]
  %v127 = vld [vmem:[%s1 + $0x338] sm:$0xff]
  %v128 = vld [vmem:[%s1 + $0x340] sm:$0xff]
  %v129 = vld [vmem:[%s1 + $0x348] sm:$0xff]
  %v130 = vld [vmem:[%s1 + $0x350] sm:$0xff]
  %v131 = vld [vmem:[%s1 + $0x358] sm:$0xff]
  %v132 = vld [vmem:[%s1 + $0x360] sm:$0xff]
  %v133 = vld [vmem:[%s1 + $0x368] sm:$0xff]
  %v134 = vld [vmem:[%s1 + $0x370] sm:$0xff]
  %v135 = vld [vmem:[%s1 + $0x378] sm:$0xff]
  %v136 = vld [vmem:[%s1 + $0x380] sm:$0xff]
  %v137 = vld [vmem:[%s1 + $0x388] sm:$0xff]
  %v138 = vld [vmem:[%s1 + $0x390] sm:$0xff]
  %v139 = vld [vmem:[%s1 + $0x398] sm:$0xff]
  %v140 = vld [vmem:[%s1 + $0x3a0] sm:$0xff]
  %v141 = vld [vmem:[%s1 + $0x3a8] sm:$0xff]
  %v142 = vld [vmem:[%s1 + $0x3b0] sm:$0xff]
  %v143 = vld [vmem:[%s1 + $0x3b8] sm:$0xff]
  %v144 = vld [vmem:[%s1 + $0x3c0] sm:$0xff]
  %v145 = vld [vmem:[%s1 + $0x3c8] sm:$0xff]
  %v146 = vld [vmem:[%s1 + $0x3d0] sm:$0xff]
  %v147 = vld [vmem:[%s1 + $0x3d8] sm:$0xff]
  %v148 = vld [vmem:[%s1 + $0x3e0] sm:$0xff]
  %v149 = vld [vmem:[%s1 + $0x3e8] sm:$0xff]
  %v150 = vld [vmem:[%s1 + $0x3f0] sm:$0xff]
  %v151 = vld [vmem:[%s1 + $0x3f8] sm:$0xff]
  %v152 = vld [vmem:[%s1 + $0x400] sm:$0xff]
  %v153 = vld [vmem:[%s1 + $0x408] sm:$0xff]
  %v154 = vld [vmem:[%s1 + $0x410] sm:$0xff]
  %v155 = vld [vmem:[%s1 + $0x418] sm:$0xff]
  %v156 = vld [vmem:[%s1 + $0x420] sm:$0xff]
  %v157 = vld [vmem:[%s1 + $0x428] sm:$0xff]
  %v158 = vld [vmem:[%s1 + $0x430] sm:$0xff]
  %v159 = vld [vmem:[%s1 + $0x438] sm:$0xff]
  %v160 = vld [vmem:[%s1 + $0x440] sm:$0xff]
  %v161 = vld [vmem:[%s1 + $0x448] sm:$0xff]
  %v162 = vld [vmem:[%s1 + $0x450] sm:$0xff]
  %v163 = vld [vmem:[%s1 + $0x458] sm:$0xff]
  %v164 = vld [vmem:[%s1 + $0x460] sm:$0xff]
  %v165 = vld [vmem:[%s1 + $0x468] sm:$0xff]
  %v166 = vld [vmem:[%s1 + $0x470] sm:$0xff]
  %v167 = vld [vmem:[%s1 + $0x478] sm:$0xff]
  %v168 = vld [vmem:[%s1 + $0x480] sm:$0xff]
  %v169 = vld [vmem:[%s1 + $0x488] sm:$0xff]
  %v170 = vld [vmem:[%s1 + $0x490] sm:$0xff]
  %v171 = vld [vmem:[%s1 + $0x498] sm:$0xff]
  %v172 = vld [vmem:[%s1 + $0x4a0] sm:$0xff]
  %v173 = vld [vmem:[%s1 + $0x4a8] sm:$0xff]
  %v174 = vld [vmem:[%s1 + $0x4b0] sm:$0xff]
  %v175 = vld [vmem:[%s1 + $0x4b8] sm:$0xff]
  %v176 = vld [vmem:[%s1 + $0x4c0] sm:$0xff]
  %v177 = vld [vmem:[%s1 + $0x4c8] sm:$0xff]
  %v178 = vld [vmem:[%s1 + $0x4d0] sm:$0xff]
  %v179 = vld [vmem:[%s1 + $0x4d8] sm:$0xff]
  %v180 = vld [vmem:[%s1 + $0x4e0] sm:$0xff]
  %v181 = vld [vmem:[%s1 + $0x4e8] sm:$0xff]
  %v182 = vld [vmem:[%s1 + $0x4f0] sm:$0xff]
  %v183 = vld [vmem:[%s1 + $0x4f8] sm:$0xff]
  %v184 = vld [vmem:[%s1 + $0x500] sm:$0xff]
  %v185 = vld [vmem:[%s1 + $0x508] sm:$0xff]
  %v186 = vld [vmem:[%s1 + $0x510] sm:$0xff]
  %v187 = vld [vmem:[%s1 + $0x518] sm:$0xff]
  %v188 = vld [vmem:[%s1 + $0x520] sm:$0xff]
  %v189 = vld [vmem:[%s1 + $0x528] sm:$0xff]
  %v190 = vld [vmem:[%s1 + $0x530] sm:$0xff]
  %v191 = vld [vmem:[%s1 + $0x538] sm:$0xff]
  %v192 = vld [vmem:[%s1 + $0x540] sm:$0xff]
  %v193 = vld [vmem:[%s1 + $0x548] sm:$0xff]
  %v194 = vld [vmem:[%s1 + $0x550] sm:$0xff]
  %v195 = vld [vmem:[%s1 + $0x558] sm:$0xff]
  %v196 = vld [vmem:[%s1 + $0x560] sm:$0xff]
  %v197 = vld [vmem:[%s1 + $0x568] sm:$0xff]
  %v198 = vld [vmem:[%s1 + $0x570] sm:$0xff]
  %v199 = vld [vmem:[%s1 + $0x578] sm:$0xff]
  %v200 = vld [vmem:[%s1 + $0x580] sm:$0xff]
  %v201 = vld [vmem:[%s1 + $0x588] sm:$0xff]
  %v202 = vld [vmem:[%s1 + $0x590] sm:$0xff]
  %v203 = vld [vmem:[%s1 + $0x598] sm:$0xff]
  %v204 = vld [vmem:[%s1 + $0x5a0] sm:$0xff]
  %v205 = vld [vmem:[%s1 + $0x5a8] sm:$0xff]
  %v206 = vld [vmem:[%s1 + $0x5b0] sm:$0xff]
  %v207 = vld [vmem:[%s1 + $0x5b8] sm:$0xff]
  %v208 = vld [vmem:[%s1 + $0x5c0] sm:$0xff]
  %v209 = vld [vmem:[%s1 + $0x5c8] sm:$0xff]
  %v210 = vld [vmem:[%s1 + $0x5d0] sm:$0xff]
  %v211 = vld [vmem:[%s1 + $0x5d8] sm:$0xff]
  %v212 = vld [vmem:[%s1 + $0x5e0] sm:$0xff]
  %v213 = vld [vmem:[%s1 + $0x5e8] sm:$0xff]
  %v214 = vld [vmem:[%s1 + $0x5f0] sm:$0xff]
  %v215 = vld [vmem:[%s1 + $0x5f8] sm:$0xff]
  %v216 = vld [vmem:[%s1 + $0x600] sm:$0xff]
  %v217 = vld [vmem:[%s1 + $0x608] sm:$0xff]
  %v218 = vld [vmem:[%s1 + $0x610] sm:$0xff]
  %v219 = vld [vmem:[%s1 + $0x618] sm:$0xff]
  %v220 = vld [vmem:[%s1 + $0x620] sm:$0xff]
  %v221 = vld [vmem:[%s1 + $0x628] sm:$0xff]
  %v222 = vld [vmem:[%s1 + $0x630] sm:$0xff]
  %v223 = vld [vmem:[%s1 + $0x638] sm:$0xff]
  %v224 = vld [vmem:[%s1 + $0x640] sm:$0xff]
  %v225 = vld [vmem:[%s1 + $0x648] sm:$0xff]
  %v226 = vld [vmem:[%s1 + $0x650] sm:$0xff]
  %v227 = vld [vmem:[%s1 + $0x658] sm:$0xff]
  %v228 = vld [vmem:[%s1 + $0x660] sm:$0xff]
  %v229 = vld [vmem:[%s1 + $0x668] sm:$0xff]
  %v230 = vld [vmem:[%s1 + $0x670] sm:$0xff]
  %v231 = vld [vmem:[%s1 + $0x678] sm:$0xff]
  %v232 = vld [vmem:[%s1 + $0x680] sm:$0xff]
  %v233 = vld [vmem:[%s1 + $0x688] sm:$0xff]
  %v234 = vld [vmem:[%s1 + $0x690] sm:$0xff]
  %v235 = vld [vmem:[%s1 + $0x698] sm:$0xff]
  %v236 = vld [vmem:[%s1 + $0x6a0] sm:$0xff]
  %v237 = vld [vmem:[%s1 + $0x6a8] sm:$0xff]
  %v238 = vld [vmem:[%s1 + $0x6b0] sm:$0xff]
  %v239 = vld [vmem:[%s1 + $0x6b8] sm:$0xff]
  %v240 = vld [vmem:[%s1 + $0x6c0] sm:$0xff]
  %v241 = vld [vmem:[%s1 + $0x6c8] sm:$0xff]
  %v242 = vld [vmem:[%s1 + $0x6d0] sm:$0xff]
  %v243 = vld [vmem:[%s1 + $0x6d8] sm:$0xff]
  %v244 = vld [vmem:[%s1 + $0x6e0] sm:$0xff]
  %v245 = vld [vmem:[%s1 + $0x6e8] sm:$0xff]
  %v246 = vld [vmem:[%s1 + $0x6f0] sm:$0xff]
  %v247 = vld [vmem:[%s1 + $0x6f8] sm:$0xff]
  %v248 = vld [vmem:[%s1 + $0x700] sm:$0xff]
  %v249 = vld [vmem:[%s1 + $0x708] sm:$0xff]
  %v250 = vld [vmem:[%s1 + $0x710] sm:$0xff]
  %v251 = vld [vmem:[%s1 + $0x718] sm:$0xff]
  %v252 = vld [vmem:[%s1 + $0x720] sm:$0xff]
  %v253 = vld [vmem:[%s1 + $0x728] sm:$0xff]
  %v254 = vld [vmem:[%s1 + $0x730] sm:$0xff]
  %v255 = vld [vmem:[%s1 + $0x738] sm:$0xff]
  %v256 = vld [vmem:[%s1 + $0x740] sm:$0xff]
  %v257 = vld [vmem:[%s1 + $0x748] sm:$0xff]
  %v258 = vld [vmem:[%s1 + $0x750] sm:$0xff]
  %v259 = vld [vmem:[%s1 + $0x758] sm:$0xff]
  %v260 = vld [vmem:[%s1 + $0x760] sm:$0xff]
  %v261 = vld [vmem:[%s1 + $0x768] sm:$0xff]
  %v262 = vld [vmem:[%s1 + $0x770] sm:$0xff]
  %v263 = vld [vmem:[%s1 + $0x778] sm:$0xff]
  %v264 = vld [vmem:[%s1 + $0x780] sm:$0xff]
  %v265 = vld [vmem:[%s1 + $0x788] sm:$0xff]
  %v266 = vld [vmem:[%s1 + $0x790] sm:$0xff]
  %v267 = vld [vmem:[%s1 + $0x798] sm:$0xff]
  %v268 = vld [vmem:[%s1 + $0x7a0] sm:$0xff]
  %v269 = vld [vmem:[%s1 + $0x7a8] sm:$0xff]
  %v270 = vld [vmem:[%s1 + $0x7b0] sm:$0xff]
  %v271 = vld [vmem:[%s1 + $0x7b8] sm:$0xff]
  %v272 = vld [vmem:[%s1 + $0x7c0] sm:$0xff]
  %v273 = vld [vmem:[%s1 + $0x7c8] sm:$0xff]
  %v274 = vld [vmem:[%s1 + $0x7d0] sm:$0xff]
  %v275 = vld [vmem:[%s1 + $0x7d8] sm:$0xff]
  %v276 = vld [vmem:[%s1 + $0x7e0] sm:$0xff]
  %v277 = vld [vmem:[%s1 + $0x7e8] sm:$0xff]
  %v278 = vld [vmem:[%s1 + $0x7f0] sm:$0xff]
  %v279 = vld [vmem:[%s1 + $0x7f8] sm:$0xff]
  %v280 = vld [vmem:[%s2] sm:$0xf]
  %v282 = vlaneseq
  %v283 = vshrl.u32 %v282, 7
  %v284 = vsub.s32 0, %v283
  %v285 = vrot.slane %v280, %v284
  %v286 = vlaneseq
  %v287 = vshrl.u32 %v286, 7
  %v288 = vsub.s32 1, %v287
  %v289 = vrot.slane %v280, %v288
  %v290 = vlaneseq
  %v291 = vshrl.u32 %v290, 7
  %v292 = vsub.s32 2, %v291
  %v293 = vrot.slane %v280, %v292
  %v294 = vlaneseq
  %v295 = vshrl.u32 %v294, 7
  %v296 = vsub.s32 3, %v295
  %v297 = vrot.slane %v280, %v296
  %302 = vmatprep.subr.mxu0 %v85
  %303 = vmatpush1.msra.mxu0 %v84
  %304 = vmatprep.subr.mxu0 %v81
  %305 = vmatpush1.msra.mxu0 %v80
  %306 = vmatprep.subr.mxu0 %v77
  %307 = vmatpush1.msra.mxu0 %v76
  %308 = vmatprep.subr.mxu0 %v73
  %309 = vmatpush1.msra.mxu0 %v72
  %310 = vmatprep.subr.mxu0 %v69
  %311 = vmatpush1.msra.mxu0 %v68
  %312 = vmatprep.subr.mxu0 %v65
  %313 = vmatpush1.msra.mxu0 %v64
  %314 = vmatprep.subr.mxu0 %v61
  %315 = vmatpush1.msra.mxu0 %v60
  %316 = vmatprep.subr.mxu0 %v57
  %317 = vmatpush1.msra.mxu0 %v56
  %318 = vmatprep.subr.mxu0 %v53
  %319 = vmatpush1.msra.mxu0 %v52
  %320 = vmatprep.subr.mxu0 %v49
  %321 = vmatpush1.msra.mxu0 %v48
  %322 = vmatprep.subr.mxu0 %v45
  %323 = vmatpush1.msra.mxu0 %v44
  %324 = vmatprep.subr.mxu0 %v41
  %325 = vmatpush1.msra.mxu0 %v40
  %326 = vmatprep.subr.mxu0 %v37
  %327 = vmatpush1.msra.mxu0 %v36
  %328 = vmatprep.subr.mxu0 %v33
  %329 = vmatpush1.msra.mxu0 %v32
  %330 = vmatprep.subr.mxu0 %v29
  %331 = vmatpush1.msra.mxu0 %v28
  %332 = vmatprep.subr.mxu0 %v25
  %333 = vmatpush1.msra.mxu0 %v24
  %334 = vmatprep.subr.mxu0 %v149
  %335 = vmatpush2.msra.mxu0 %v148
  %336 = vmatprep.subr.mxu0 %v145
  %337 = vmatpush2.msra.mxu0 %v144
  %338 = vmatprep.subr.mxu0 %v141
  %339 = vmatpush2.msra.mxu0 %v140
  %340 = vmatprep.subr.mxu0 %v137
  %341 = vmatpush2.msra.mxu0 %v136
  %342 = vmatprep.subr.mxu0 %v133
  %343 = vmatpush2.msra.mxu0 %v132
  %344 = vmatprep.subr.mxu0 %v129
  %345 = vmatpush2.msra.mxu0 %v128
  %346 = vmatprep.subr.mxu0 %v125
  %347 = vmatpush2.msra.mxu0 %v124
  %348 = vmatprep.subr.mxu0 %v121
  %349 = vmatpush2.msra.mxu0 %v120
  %350 = vmatprep.subr.mxu0 %v117
  %351 = vmatpush2.msra.mxu0 %v116
  %352 = vmatprep.subr.mxu0 %v113
  %353 = vmatpush2.msra.mxu0 %v112
  %354 = vmatprep.subr.mxu0 %v109
  %355 = vmatpush2.msra.mxu0 %v108
  %356 = vmatprep.subr.mxu0 %v105
  %357 = vmatpush2.msra.mxu0 %v104
  %358 = vmatprep.subr.mxu0 %v101
  %359 = vmatpush2.msra.mxu0 %v100
  %360 = vmatprep.subr.mxu0 %v97
  %361 = vmatpush2.msra.mxu0 %v96
  %362 = vmatprep.subr.mxu0 %v93
  %363 = vmatpush2.msra.mxu0 %v92
  %364 = vmatprep.subr.mxu0 %v89
  %365 = vmatpush2.msra.mxu0 %v88
  %366 = vmatprep.mubr.f32.mxu0 %v21
  %367 = vmatmul.mubr.f32.gmra.mxu0 %v20
  %v368 = vpop.f32.mrf.mxu0
  %v369 = vadd.f32 %v285, %v368
  %v370 = vpop.f32.mrf.mxu0
  %v371 = vadd.f32 %v289, %v370
  %372 = vdwg.mxu0
  %373 = vmatprep.subr.mxu0 %v213
  %374 = vmatpush1.msra.mxu0 %v212
  %375 = vmatprep.subr.mxu0 %v209
  %376 = vmatpush1.msra.mxu0 %v208
  %377 = vmatprep.subr.mxu0 %v205
  %378 = vmatpush1.msra.mxu0 %v204
  %379 = vmatprep.subr.mxu0 %v201
  %380 = vmatpush1.msra.mxu0 %v200
  %381 = vmatprep.subr.mxu0 %v197
  %382 = vmatpush1.msra.mxu0 %v196
  %383 = vmatprep.subr.mxu0 %v193
  %384 = vmatpush1.msra.mxu0 %v192
  %385 = vmatprep.subr.mxu0 %v189
  %386 = vmatpush1.msra.mxu0 %v188
  %387 = vmatprep.subr.mxu0 %v185
  %388 = vmatpush1.msra.mxu0 %v184
  %389 = vmatprep.subr.mxu0 %v181
  %390 = vmatpush1.msra.mxu0 %v180
  %391 = vmatprep.subr.mxu0 %v177
  %392 = vmatpush1.msra.mxu0 %v176
  %393 = vmatprep.subr.mxu0 %v173
  %394 = vmatpush1.msra.mxu0 %v172
  %395 = vmatprep.subr.mxu0 %v169
  %396 = vmatpush1.msra.mxu0 %v168
  %397 = vmatprep.subr.mxu0 %v165
  %398 = vmatpush1.msra.mxu0 %v164
  %399 = vmatprep.subr.mxu0 %v161
  %400 = vmatpush1.msra.mxu0 %v160
  %401 = vmatprep.subr.mxu0 %v157
  %402 = vmatpush1.msra.mxu0 %v156
  %403 = vmatprep.subr.mxu0 %v153
  %404 = vmatpush1.msra.mxu0 %v152
  %405 = vmatprep.subr.mxu0 %v277
  %406 = vmatpush2.msra.mxu0 %v276
  %407 = vmatprep.subr.mxu0 %v273
  %408 = vmatpush2.msra.mxu0 %v272
  %409 = vmatprep.subr.mxu0 %v269
  %410 = vmatpush2.msra.mxu0 %v268
  %411 = vmatprep.subr.mxu0 %v265
  %412 = vmatpush2.msra.mxu0 %v264
  %413 = vmatprep.subr.mxu0 %v261
  %414 = vmatpush2.msra.mxu0 %v260
  %415 = vmatprep.subr.mxu0 %v257
  %416 = vmatpush2.msra.mxu0 %v256
  %417 = vmatprep.subr.mxu0 %v253
  %418 = vmatpush2.msra.mxu0 %v252
  %419 = vmatprep.subr.mxu0 %v249
  %420 = vmatpush2.msra.mxu0 %v248
  %421 = vmatprep.subr.mxu0 %v245
  %422 = vmatpush2.msra.mxu0 %v244
  %423 = vmatprep.subr.mxu0 %v241
  %424 = vmatpush2.msra.mxu0 %v240
  %425 = vmatprep.subr.mxu0 %v237
  %426 = vmatpush2.msra.mxu0 %v236
  %427 = vmatprep.subr.mxu0 %v233
  %428 = vmatpush2.msra.mxu0 %v232
  %429 = vmatprep.subr.mxu0 %v229
  %430 = vmatpush2.msra.mxu0 %v228
  %431 = vmatprep.subr.mxu0 %v225
  %432 = vmatpush2.msra.mxu0 %v224
  %433 = vmatprep.subr.mxu0 %v221
  %434 = vmatpush2.msra.mxu0 %v220
  %435 = vmatprep.subr.mxu0 %v217
  %436 = vmatpush2.msra.mxu0 %v216
  %437 = vmatprep.mubr.f32.mxu0 %v23
  %438 = vmatmul.mubr.f32.gmra.mxu0 %v22
  %v439 = vpop.f32.mrf.mxu0
  %v440 = vadd.f32 %v369, %v439
  %v441 = vpop.f32.mrf.mxu0
  %v442 = vadd.f32 %v371, %v441
  %443 = vdwg.mxu0
  %444 = vmatprep.subr.mxu0 %v87
  %445 = vmatpush1.msra.mxu0 %v86
  %446 = vmatprep.subr.mxu0 %v83
  %447 = vmatpush1.msra.mxu0 %v82
  %448 = vmatprep.subr.mxu0 %v79
  %449 = vmatpush1.msra.mxu0 %v78
  %450 = vmatprep.subr.mxu0 %v75
  %451 = vmatpush1.msra.mxu0 %v74
  %452 = vmatprep.subr.mxu0 %v71
  %453 = vmatpush1.msra.mxu0 %v70
  %454 = vmatprep.subr.mxu0 %v67
  %455 = vmatpush1.msra.mxu0 %v66
  %456 = vmatprep.subr.mxu0 %v63
  %457 = vmatpush1.msra.mxu0 %v62
  %458 = vmatprep.subr.mxu0 %v59
  %459 = vmatpush1.msra.mxu0 %v58
  %460 = vmatprep.subr.mxu0 %v55
  %461 = vmatpush1.msra.mxu0 %v54
  %462 = vmatprep.subr.mxu0 %v51
  %463 = vmatpush1.msra.mxu0 %v50
  %464 = vmatprep.subr.mxu0 %v47
  %465 = vmatpush1.msra.mxu0 %v46
  %466 = vmatprep.subr.mxu0 %v43
  %467 = vmatpush1.msra.mxu0 %v42
  %468 = vmatprep.subr.mxu0 %v39
  %469 = vmatpush1.msra.mxu0 %v38
  %470 = vmatprep.subr.mxu0 %v35
  %471 = vmatpush1.msra.mxu0 %v34
  %472 = vmatprep.subr.mxu0 %v31
  %473 = vmatpush1.msra.mxu0 %v30
  %474 = vmatprep.subr.mxu0 %v27
  %475 = vmatpush1.msra.mxu0 %v26
  %476 = vmatprep.subr.mxu0 %v151
  %477 = vmatpush2.msra.mxu0 %v150
  %478 = vmatprep.subr.mxu0 %v147
  %479 = vmatpush2.msra.mxu0 %v146
  %480 = vmatprep.subr.mxu0 %v143
  %481 = vmatpush2.msra.mxu0 %v142
  %482 = vmatprep.subr.mxu0 %v139
  %483 = vmatpush2.msra.mxu0 %v138
  %484 = vmatprep.subr.mxu0 %v135
  %485 = vmatpush2.msra.mxu0 %v134
  %486 = vmatprep.subr.mxu0 %v131
  %487 = vmatpush2.msra.mxu0 %v130
  %488 = vmatprep.subr.mxu0 %v127
  %489 = vmatpush2.msra.mxu0 %v126
  %490 = vmatprep.subr.mxu0 %v123
  %491 = vmatpush2.msra.mxu0 %v122
  %492 = vmatprep.subr.mxu0 %v119
  %493 = vmatpush2.msra.mxu0 %v118
  %494 = vmatprep.subr.mxu0 %v115
  %495 = vmatpush2.msra.mxu0 %v114
  %496 = vmatprep.subr.mxu0 %v111
  %497 = vmatpush2.msra.mxu0 %v110
  %498 = vmatprep.subr.mxu0 %v107
  %499 = vmatpush2.msra.mxu0 %v106
  %500 = vmatprep.subr.mxu0 %v103
  %501 = vmatpush2.msra.mxu0 %v102
  %502 = vmatprep.subr.mxu0 %v99
  %503 = vmatpush2.msra.mxu0 %v98
  %504 = vmatprep.subr.mxu0 %v95
  %505 = vmatpush2.msra.mxu0 %v94
  %506 = vmatprep.subr.mxu0 %v91
  %507 = vmatpush2.msra.mxu0 %v90
  %508 = vmatprep.mubr.f32.mxu0 %v21
  %509 = vmatmul.mubr.f32.gmra.mxu0 %v20
  %v510 = vpop.f32.mrf.mxu0
  %v511 = vadd.f32 %v293, %v510
  %v512 = vpop.f32.mrf.mxu0
  %v513 = vadd.f32 %v297, %v512
  %514 = vdwg.mxu0
  %515 = vmatprep.subr.mxu0 %v215
  %516 = vmatpush1.msra.mxu0 %v214
  %517 = vmatprep.subr.mxu0 %v211
  %518 = vmatpush1.msra.mxu0 %v210
  %519 = vmatprep.subr.mxu0 %v207
  %520 = vmatpush1.msra.mxu0 %v206
  %521 = vmatprep.subr.mxu0 %v203
  %522 = vmatpush1.msra.mxu0 %v202
  %523 = vmatprep.subr.mxu0 %v199
  %524 = vmatpush1.msra.mxu0 %v198
  %525 = vmatprep.subr.mxu0 %v195
  %526 = vmatpush1.msra.mxu0 %v194
  %527 = vmatprep.subr.mxu0 %v191
  %528 = vmatpush1.msra.mxu0 %v190
  %529 = vmatprep.subr.mxu0 %v187
  %530 = vmatpush1.msra.mxu0 %v186
  %531 = vmatprep.subr.mxu0 %v183
  %532 = vmatpush1.msra.mxu0 %v182
  %533 = vmatprep.subr.mxu0 %v179
  %534 = vmatpush1.msra.mxu0 %v178
  %535 = vmatprep.subr.mxu0 %v175
  %536 = vmatpush1.msra.mxu0 %v174
  %537 = vmatprep.subr.mxu0 %v171
  %538 = vmatpush1.msra.mxu0 %v170
  %539 = vmatprep.subr.mxu0 %v167
  %540 = vmatpush1.msra.mxu0 %v166
  %541 = vmatprep.subr.mxu0 %v163
  %542 = vmatpush1.msra.mxu0 %v162
  %543 = vmatprep.subr.mxu0 %v159
  %544 = vmatpush1.msra.mxu0 %v158
  %545 = vmatprep.subr.mxu0 %v155
  %546 = vmatpush1.msra.mxu0 %v154
  %547 = vmatprep.subr.mxu0 %v279
  %548 = vmatpush2.msra.mxu0 %v278
  %549 = vmatprep.subr.mxu0 %v275
  %550 = vmatpush2.msra.mxu0 %v274
  %551 = vmatprep.subr.mxu0 %v271
  %552 = vmatpush2.msra.mxu0 %v270
  %553 = vmatprep.subr.mxu0 %v267
  %554 = vmatpush2.msra.mxu0 %v266
  %555 = vmatprep.subr.mxu0 %v263
  %556 = vmatpush2.msra.mxu0 %v262
  %557 = vmatprep.subr.mxu0 %v259
  %558 = vmatpush2.msra.mxu0 %v258
  %559 = vmatprep.subr.mxu0 %v255
  %560 = vmatpush2.msra.mxu0 %v254
  %561 = vmatprep.subr.mxu0 %v251
  %562 = vmatpush2.msra.mxu0 %v250
  %563 = vmatprep.subr.mxu0 %v247
  %564 = vmatpush2.msra.mxu0 %v246
  %565 = vmatprep.subr.mxu0 %v243
  %566 = vmatpush2.msra.mxu0 %v242
  %567 = vmatprep.subr.mxu0 %v239
  %568 = vmatpush2.msra.mxu0 %v238
  %569 = vmatprep.subr.mxu0 %v235
  %570 = vmatpush2.msra.mxu0 %v234
  %571 = vmatprep.subr.mxu0 %v231
  %572 = vmatpush2.msra.mxu0 %v230
  %573 = vmatprep.subr.mxu0 %v227
  %574 = vmatpush2.msra.mxu0 %v226
  %575 = vmatprep.subr.mxu0 %v223
  %576 = vmatpush2.msra.mxu0 %v222
  %577 = vmatprep.subr.mxu0 %v219
  %578 = vmatpush2.msra.mxu0 %v218
  %579 = vmatprep.mubr.f32.mxu0 %v23
  %580 = vmatmul.mubr.f32.gmra.mxu0 %v22
  %v581 = vpop.f32.mrf.mxu0
  %v582 = vadd.f32 %v511, %v581
  %v583 = vpop.f32.mrf.mxu0
  %v584 = vadd.f32 %v513, %v583
  %585 = vdwg.mxu0
  %vm586 = vcmp.gt.f32.partialorder %v440, 0.0
  %vm587 = vcmp.gt.f32.partialorder %v442, 0.0
  %vm588 = vcmp.gt.f32.partialorder %v582, 0.0
  %vm589 = vcmp.gt.f32.partialorder %v584, 0.0
  %v590 = vmul.f32 %v440, 0.01
  %v591 = vmul.f32 %v442, 0.01
  %v592 = vmul.f32 %v582, 0.01
  %v593 = vmul.f32 %v584, 0.01
  %v594 = vsel %vm586, %v440, %v590
  %v595 = vsel %vm587, %v442, %v591
  %v596 = vsel %vm588, %v582, %v592
  %v597 = vsel %vm589, %v584, %v593
  %v598 = vld [vmem:[%s3] sm:$0xff]
  %v599 = vld [vmem:[%s3 + $0x8] sm:$0xff]
  %v600 = vld [vmem:[%s3 + $0x10] sm:$0xff]
  %v601 = vld [vmem:[%s3 + $0x18] sm:$0xff]
  %v602 = vld [vmem:[%s3 + $0x20] sm:$0xff]
  %v603 = vld [vmem:[%s3 + $0x28] sm:$0xff]
  %v604 = vld [vmem:[%s3 + $0x30] sm:$0xff]
  %v605 = vld [vmem:[%s3 + $0x38] sm:$0xff]
  %v606 = vld [vmem:[%s3 + $0x40] sm:$0xff]
  %v607 = vld [vmem:[%s3 + $0x48] sm:$0xff]
  %v608 = vld [vmem:[%s3 + $0x50] sm:$0xff]
  %v609 = vld [vmem:[%s3 + $0x58] sm:$0xff]
  %v610 = vld [vmem:[%s3 + $0x60] sm:$0xff]
  %v611 = vld [vmem:[%s3 + $0x68] sm:$0xff]
  %v612 = vld [vmem:[%s3 + $0x70] sm:$0xff]
  %v613 = vld [vmem:[%s3 + $0x78] sm:$0xff]
  %v614 = vld [vmem:[%s3 + $0x80] sm:$0xff]
  %v615 = vld [vmem:[%s3 + $0x88] sm:$0xff]
  %v616 = vld [vmem:[%s3 + $0x90] sm:$0xff]
  %v617 = vld [vmem:[%s3 + $0x98] sm:$0xff]
  %v618 = vld [vmem:[%s3 + $0xa0] sm:$0xff]
  %v619 = vld [vmem:[%s3 + $0xa8] sm:$0xff]
  %v620 = vld [vmem:[%s3 + $0xb0] sm:$0xff]
  %v621 = vld [vmem:[%s3 + $0xb8] sm:$0xff]
  %v622 = vld [vmem:[%s3 + $0xc0] sm:$0xff]
  %v623 = vld [vmem:[%s3 + $0xc8] sm:$0xff]
  %v624 = vld [vmem:[%s3 + $0xd0] sm:$0xff]
  %v625 = vld [vmem:[%s3 + $0xd8] sm:$0xff]
  %v626 = vld [vmem:[%s3 + $0xe0] sm:$0xff]
  %v627 = vld [vmem:[%s3 + $0xe8] sm:$0xff]
  %v628 = vld [vmem:[%s3 + $0xf0] sm:$0xff]
  %v629 = vld [vmem:[%s3 + $0xf8] sm:$0xff]
  %v630 = vld [vmem:[%s3 + $0x100] sm:$0xff]
  %v631 = vld [vmem:[%s3 + $0x108] sm:$0xff]
  %v632 = vld [vmem:[%s3 + $0x110] sm:$0xff]
  %v633 = vld [vmem:[%s3 + $0x118] sm:$0xff]
  %v634 = vld [vmem:[%s3 + $0x120] sm:$0xff]
  %v635 = vld [vmem:[%s3 + $0x128] sm:$0xff]
  %v636 = vld [vmem:[%s3 + $0x130] sm:$0xff]
  %v637 = vld [vmem:[%s3 + $0x138] sm:$0xff]
  %v638 = vld [vmem:[%s3 + $0x140] sm:$0xff]
  %v639 = vld [vmem:[%s3 + $0x148] sm:$0xff]
  %v640 = vld [vmem:[%s3 + $0x150] sm:$0xff]
  %v641 = vld [vmem:[%s3 + $0x158] sm:$0xff]
  %v642 = vld [vmem:[%s3 + $0x160] sm:$0xff]
  %v643 = vld [vmem:[%s3 + $0x168] sm:$0xff]
  %v644 = vld [vmem:[%s3 + $0x170] sm:$0xff]
  %v645 = vld [vmem:[%s3 + $0x178] sm:$0xff]
  %v646 = vld [vmem:[%s3 + $0x180] sm:$0xff]
  %v647 = vld [vmem:[%s3 + $0x188] sm:$0xff]
  %v648 = vld [vmem:[%s3 + $0x190] sm:$0xff]
  %v649 = vld [vmem:[%s3 + $0x198] sm:$0xff]
  %v650 = vld [vmem:[%s3 + $0x1a0] sm:$0xff]
  %v651 = vld [vmem:[%s3 + $0x1a8] sm:$0xff]
  %v652 = vld [vmem:[%s3 + $0x1b0] sm:$0xff]
  %v653 = vld [vmem:[%s3 + $0x1b8] sm:$0xff]
  %v654 = vld [vmem:[%s3 + $0x1c0] sm:$0xff]
  %v655 = vld [vmem:[%s3 + $0x1c8] sm:$0xff]
  %v656 = vld [vmem:[%s3 + $0x1d0] sm:$0xff]
  %v657 = vld [vmem:[%s3 + $0x1d8] sm:$0xff]
  %v658 = vld [vmem:[%s3 + $0x1e0] sm:$0xff]
  %v659 = vld [vmem:[%s3 + $0x1e8] sm:$0xff]
  %v660 = vld [vmem:[%s3 + $0x1f0] sm:$0xff]
  %v661 = vld [vmem:[%s3 + $0x1f8] sm:$0xff]
  %v662 = vld [vmem:[%s4] sm:$0x1]
  %v664 = vlaneseq
  %v665 = vshrl.u32 %v664, 7
  %v666 = vsub.s32 0, %v665
  %v667 = vrot.slane %v662, %v666
  %669 = vmatprep.subr.mxu0 0.0
  %670 = vmatpush1.msra.mxu0 %v613
  %671 = vmatprep.subr.mxu0 0.0
  %672 = vmatpush1.msra.mxu0 %v612
  %673 = vmatprep.subr.mxu0 0.0
  %674 = vmatpush1.msra.mxu0 %v611
  %675 = vmatprep.subr.mxu0 0.0
  %676 = vmatpush1.msra.mxu0 %v610
  %677 = vmatprep.subr.mxu0 0.0
  %678 = vmatpush1.msra.mxu0 %v609
  %679 = vmatprep.subr.mxu0 0.0
  %680 = vmatpush1.msra.mxu0 %v608
  %681 = vmatprep.subr.mxu0 0.0
  %682 = vmatpush1.msra.mxu0 %v607
  %683 = vmatprep.subr.mxu0 0.0
  %684 = vmatpush1.msra.mxu0 %v606
  %685 = vmatprep.subr.mxu0 0.0
  %686 = vmatpush1.msra.mxu0 %v605
  %687 = vmatprep.subr.mxu0 0.0
  %688 = vmatpush1.msra.mxu0 %v604
  %689 = vmatprep.subr.mxu0 0.0
  %690 = vmatpush1.msra.mxu0 %v603
  %691 = vmatprep.subr.mxu0 0.0
  %692 = vmatpush1.msra.mxu0 %v602
  %693 = vmatprep.subr.mxu0 0.0
  %694 = vmatpush1.msra.mxu0 %v601
  %695 = vmatprep.subr.mxu0 0.0
  %696 = vmatpush1.msra.mxu0 %v600
  %697 = vmatprep.subr.mxu0 0.0
  %698 = vmatpush1.msra.mxu0 %v599
  %699 = vmatprep.subr.mxu0 0.0
  %700 = vmatpush1.msra.mxu0 %v598
  %701 = vmatprep.subr.mxu0 0.0
  %702 = vmatpush2.msra.mxu0 %v629
  %703 = vmatprep.subr.mxu0 0.0
  %704 = vmatpush2.msra.mxu0 %v628
  %705 = vmatprep.subr.mxu0 0.0
  %706 = vmatpush2.msra.mxu0 %v627
  %707 = vmatprep.subr.mxu0 0.0
  %708 = vmatpush2.msra.mxu0 %v626
  %709 = vmatprep.subr.mxu0 0.0
  %710 = vmatpush2.msra.mxu0 %v625
  %711 = vmatprep.subr.mxu0 0.0
  %712 = vmatpush2.msra.mxu0 %v624
  %713 = vmatprep.subr.mxu0 0.0
  %714 = vmatpush2.msra.mxu0 %v623
  %715 = vmatprep.subr.mxu0 0.0
  %716 = vmatpush2.msra.mxu0 %v622
  %717 = vmatprep.subr.mxu0 0.0
  %718 = vmatpush2.msra.mxu0 %v621
  %719 = vmatprep.subr.mxu0 0.0
  %720 = vmatpush2.msra.mxu0 %v620
  %721 = vmatprep.subr.mxu0 0.0
  %722 = vmatpush2.msra.mxu0 %v619
  %723 = vmatprep.subr.mxu0 0.0
  %724 = vmatpush2.msra.mxu0 %v618
  %725 = vmatprep.subr.mxu0 0.0
  %726 = vmatpush2.msra.mxu0 %v617
  %727 = vmatprep.subr.mxu0 0.0
  %728 = vmatpush2.msra.mxu0 %v616
  %729 = vmatprep.subr.mxu0 0.0
  %730 = vmatpush2.msra.mxu0 %v615
  %731 = vmatprep.subr.mxu0 0.0
  %732 = vmatpush2.msra.mxu0 %v614
  %733 = vmatprep.mubr.f32.mxu0 %v595
  %734 = vmatmul.mubr.f32.gmra.mxu0 %v594
  %v735 = vpop.f32.mrf.mxu0
  %v736 = vadd.f32 %v667, %v735
  %v737 = vpop.f32.mrf.mxu0
  %738 = vdwg.mxu0
  %739 = vmatprep.subr.mxu0 0.0
  %740 = vmatpush1.msra.mxu0 %v645
  %741 = vmatprep.subr.mxu0 0.0
  %742 = vmatpush1.msra.mxu0 %v644
  %743 = vmatprep.subr.mxu0 0.0
  %744 = vmatpush1.msra.mxu0 %v643
  %745 = vmatprep.subr.mxu0 0.0
  %746 = vmatpush1.msra.mxu0 %v642
  %747 = vmatprep.subr.mxu0 0.0
  %748 = vmatpush1.msra.mxu0 %v641
  %749 = vmatprep.subr.mxu0 0.0
  %750 = vmatpush1.msra.mxu0 %v640
  %751 = vmatprep.subr.mxu0 0.0
  %752 = vmatpush1.msra.mxu0 %v639
  %753 = vmatprep.subr.mxu0 0.0
  %754 = vmatpush1.msra.mxu0 %v638
  %755 = vmatprep.subr.mxu0 0.0
  %756 = vmatpush1.msra.mxu0 %v637
  %757 = vmatprep.subr.mxu0 0.0
  %758 = vmatpush1.msra.mxu0 %v636
  %759 = vmatprep.subr.mxu0 0.0
  %760 = vmatpush1.msra.mxu0 %v635
  %761 = vmatprep.subr.mxu0 0.0
  %762 = vmatpush1.msra.mxu0 %v634
  %763 = vmatprep.subr.mxu0 0.0
  %764 = vmatpush1.msra.mxu0 %v633
  %765 = vmatprep.subr.mxu0 0.0
  %766 = vmatpush1.msra.mxu0 %v632
  %767 = vmatprep.subr.mxu0 0.0
  %768 = vmatpush1.msra.mxu0 %v631
  %769 = vmatprep.subr.mxu0 0.0
  %770 = vmatpush1.msra.mxu0 %v630
  %771 = vmatprep.subr.mxu0 0.0
  %772 = vmatpush2.msra.mxu0 %v661
  %773 = vmatprep.subr.mxu0 0.0
  %774 = vmatpush2.msra.mxu0 %v660
  %775 = vmatprep.subr.mxu0 0.0
  %776 = vmatpush2.msra.mxu0 %v659
  %777 = vmatprep.subr.mxu0 0.0
  %778 = vmatpush2.msra.mxu0 %v658
  %779 = vmatprep.subr.mxu0 0.0
  %780 = vmatpush2.msra.mxu0 %v657
  %781 = vmatprep.subr.mxu0 0.0
  %782 = vmatpush2.msra.mxu0 %v656
  %783 = vmatprep.subr.mxu0 0.0
  %784 = vmatpush2.msra.mxu0 %v655
  %785 = vmatprep.subr.mxu0 0.0
  %786 = vmatpush2.msra.mxu0 %v654
  %787 = vmatprep.subr.mxu0 0.0
  %788 = vmatpush2.msra.mxu0 %v653
  %789 = vmatprep.subr.mxu0 0.0
  %790 = vmatpush2.msra.mxu0 %v652
  %791 = vmatprep.subr.mxu0 0.0
  %792 = vmatpush2.msra.mxu0 %v651
  %793 = vmatprep.subr.mxu0 0.0
  %794 = vmatpush2.msra.mxu0 %v650
  %795 = vmatprep.subr.mxu0 0.0
  %796 = vmatpush2.msra.mxu0 %v649
  %797 = vmatprep.subr.mxu0 0.0
  %798 = vmatpush2.msra.mxu0 %v648
  %799 = vmatprep.subr.mxu0 0.0
  %800 = vmatpush2.msra.mxu0 %v647
  %801 = vmatprep.subr.mxu0 0.0
  %802 = vmatpush2.msra.mxu0 %v646
  %803 = vmatprep.mubr.f32.mxu0 %v597
  %804 = vmatmul.mubr.f32.gmra.mxu0 %v596
  %v805 = vpop.f32.mrf.mxu0
  %v806 = vadd.f32 %v736, %v805
  %v807 = vpop.f32.mrf.mxu0
  %808 = vdwg.mxu0
  %v809 = vlaneseq
  %v810 = vand.u32 %v809, 127
  %vm811 = vcmp.ge.s32.totalorder %v810, 0
  %vm812 = vcmp.lt.s32.totalorder %v810, 5
  %vm813 = vmand %vm811, %vm812
  %v814 = vsel %vm813, %v806, -inf
  %815 = vmax.xlane.f32.xlu0 %v814
  %v816 = vpop.xlane.xlu0 %815
  %v817 = vsub.f32 %v814, %v816
  %v818 = vmul.f32 %v817, 1.442695
  %v819 = vpow.pop %v818
  %820 = vadd.xlane.f32.xlu0 %v819
  %v821 = vpop.xlane.xlu0 %820
  %v822 = vrcp.pop %v821
  %v823 = vmul.f32 %v819, %v822
  %v824 = vadd.f32 %v823, 0.0
  %vm825 = vcmp.ge.s32.totalorder %v810, 5
  %vm826 = vcmp.lt.s32.totalorder %v810, 8
  %vm827 = vmand %vm825, %vm826
  %v828 = vsel %vm827, %v806, -inf
  %829 = vmax.xlane.f32.xlu0 %v828
  %v830 = vpop.xlane.xlu0 %829
  %v831 = vsub.f32 %v828, %v830
  %v832 = vmul.f32 %v831, 1.442695
  %v833 = vpow.pop %v832
  %834 = vadd.xlane.f32.xlu0 %v833
  %v835 = vpop.xlane.xlu0 %834
  %v836 = vrcp.pop %v835
  %v837 = vmul.f32 %v833, %v836
  %v838 = vadd.f32 %v824, %v837
  %vm839 = vcmp.ge.s32.totalorder %v810, 8
  %vm840 = vcmp.lt.s32.totalorder %v810, 9
  %vm841 = vmand %vm839, %vm840
  %v842 = vxor.u32 %v806, 2147483648
  %v843 = vmul.f32 %v842, 1.442695
  %v844 = vpow.pop %v843
  %v845 = vadd.f32 %v844, 1.0
  %v846 = vrcp.pop %v845
  %v847 = vmul.f32 1.0, %v846
  %v848 = vsel %vm841, %v847, 0.0
  %v849 = vadd.f32 %v838, %v848
  %vm850 = vcmp.ge.s32.totalorder %v810, 9
  %vm851 = vcmp.lt.s32.totalorder %v810, 12
  %vm852 = vmand %vm850, %vm851
  %v853 = vsel %vm852, %v806, -inf
  %854 = vmax.xlane.f32.xlu0 %v853
  %v855 = vpop.xlane.xlu0 %854
  %v856 = vsub.f32 %v853, %v855
  %v857 = vmul.f32 %v856, 1.442695
  %v858 = vpow.pop %v857
  %859 = vadd.xlane.f32.xlu0 %v858
  %v860 = vpop.xlane.xlu0 %859
  %v861 = vrcp.pop %v860
  %v862 = vmul.f32 %v858, %v861
  %v863 = vadd.f32 %v849, %v862
  %vm864 = vcmp.ge.s32.totalorder %v810, 12
  %vm865 = vcmp.lt.s32.totalorder %v810, 15
  %vm866 = vmand %vm864, %vm865
  %v867 = vsel %vm866, %v806, -inf
  %868 = vmax.xlane.f32.xlu0 %v867
  %v869 = vpop.xlane.xlu0 %868
  %v870 = vsub.f32 %v867, %v869
  %v871 = vmul.f32 %v870, 1.442695
  %v872 = vpow.pop %v871
  %873 = vadd.xlane.f32.xlu0 %v872
  %v874 = vpop.xlane.xlu0 %873
  %v875 = vrcp.pop %v874
  %v876 = vmul.f32 %v872, %v875
  %v877 = vadd.f32 %v863, %v876
  %vm878 = vcmp.ge.s32.totalorder %v810, 15
  %vm879 = vcmp.lt.s32.totalorder %v810, 16
  %vm880 = vmand %vm878, %vm879
  %v881 = vsel %vm880, %v847, 0.0
  %v882 = vadd.f32 %v877, %v881
  %vm883 = vcmp.ge.s32.totalorder %v810, 16
  %vm884 = vcmp.lt.s32.totalorder %v810, 19
  %vm885 = vmand %vm883, %vm884
  %v886 = vsel %vm885, %v806, -inf
  %887 = vmax.xlane.f32.xlu0 %v886
  %v888 = vpop.xlane.xlu0 %887
  %v889 = vsub.f32 %v886, %v888
  %v890 = vmul.f32 %v889, 1.442695
  %v891 = vpow.pop %v890
  %892 = vadd.xlane.f32.xlu0 %v891
  %v893 = vpop.xlane.xlu0 %892
  %v894 = vrcp.pop %v893
  %v895 = vmul.f32 %v891, %v894
  %v896 = vadd.f32 %v882, %v895
  %vm897 = vcmp.ge.s32.totalorder %v810, 19
  %vm898 = vcmp.lt.s32.totalorder %v810, 28
  %vm899 = vmand %vm897, %vm898
  %v900 = vsel %vm899, %v806, -inf
  %901 = vmax.xlane.f32.xlu0 %v900
  %v902 = vpop.xlane.xlu0 %901
  %v903 = vsub.f32 %v900, %v902
  %v904 = vmul.f32 %v903, 1.442695
  %v905 = vpow.pop %v904
  %906 = vadd.xlane.f32.xlu0 %v905
  %v907 = vpop.xlane.xlu0 %906
  %v908 = vrcp.pop %v907
  %v909 = vmul.f32 %v905, %v908
  %v910 = vadd.f32 %v896, %v909
  %vm911 = vcmp.ge.s32.totalorder %v810, 28
  %vm912 = vcmp.lt.s32.totalorder %v810, 37
  %vm913 = vmand %vm911, %vm912
  %v914 = vsel %vm913, %v806, -inf
  %915 = vmax.xlane.f32.xlu0 %v914
  %v916 = vpop.xlane.xlu0 %915
  %v917 = vsub.f32 %v914, %v916
  %v918 = vmul.f32 %v917, 1.442695
  %v919 = vpow.pop %v918
  %920 = vadd.xlane.f32.xlu0 %v919
  %v921 = vpop.xlane.xlu0 %920
  %v922 = vrcp.pop %v921
  %v923 = vmul.f32 %v919, %v922
  %v924 = vadd.f32 %v910, %v923
  %vm925 = vcmp.ge.s32.totalorder %v810, 37
  %vm926 = vcmp.lt.s32.totalorder %v810, 46
  %vm927 = vmand %vm925, %vm926
  %v928 = vsel %vm927, %v806, -inf
  %929 = vmax.xlane.f32.xlu0 %v928
  %v930 = vpop.xlane.xlu0 %929
  %v931 = vsub.f32 %v928, %v930
  %v932 = vmul.f32 %v931, 1.442695
  %v933 = vpow.pop %v932
  %934 = vadd.xlane.f32.xlu0 %v933
  %v935 = vpop.xlane.xlu0 %934
  %v936 = vrcp.pop %v935
  %v937 = vmul.f32 %v933, %v936
  %v938 = vadd.f32 %v924, %v937
  %939 = vst [vmem:[%s5] sm:$0xff] %v938
  // Predicated region
  $region22: #{myosnet_head_forward.1} parent=0 // pred_check
    _
  $region23: #{myosnet_head_forward.1} parent=0 // pred_check_branch
    %941 = sbr.rel (0) target = $region25
  $region24: #{myosnet_head_forward.1} parent=0 // pred_region
    _
  $region25: #{myosnet_head_forward.1} parent=0 // pred_fallthru
    _
  // Predicated region
  $region26: #{myosnet_head_forward.1} parent=0 // pred_check
    _
  $region27: #{myosnet_head_forward.1} parent=0 // pred_check_branch
    %943 = sbr.rel (0) target = $region29
  $region28: #{myosnet_head_forward.1} parent=0 // pred_region
    _
  $region29: #{myosnet_head_forward.1} parent=0 // pred_fallthru
    _

</llo_original>
